<compile_context>
chip_gen: v5e
topology: v5e:2x2
jax: 0.10.0
libtpu: 0.0.40
codegen_flags: <defaults>
</compile_context>

<pallas_src>
import functools
import math

import jax
import jax.numpy as jnp
from jax.experimental import pallas as pl
from jax.experimental.pallas import tpu as pltpu

_LANE = 128
_ROW_TILE = 4096          # 4096 x 128 x 4 B = 2 MiB per f32 block (2D fast path)
_FLAT_TILE = 64 * 1024    # 1-D fallback block, in elements (conservative: rank-1
                          # blocks may pad sublanes in VMEM, so keep it modest)


def _db_to_amp_kernel(x_ref, o_ref, *, scale: float, bias: float):
    x = x_ref[...].astype(jnp.float32)
    # amplitude = 2 ** (x * log2(10)/20 + 0.5*log2(ref)): one VPU FMA + EUP exp2.
    o_ref[...] = jnp.exp2(x * scale + bias).astype(o_ref.dtype)


def _round_up(v: int, m: int) -> int:
    return ((v + m - 1) // m) * m


def _sublane_quantum(dtype) -> int:
    # Second-minor block quantum: 8 for 4-byte, 16 for 2-byte, 32 for 1-byte dtypes.
    return max(8, 32 // jnp.dtype(dtype).itemsize)


def _pick_tile(total: int, max_tile: int, quantum: int) -> int:
    """Tile size along the blocked axis.

    Tiny inputs get a single full-extent block (any size is legal when it
    equals the array dim).  Otherwise the tile is a multiple of `quantum`,
    capped at `max_tile`, and always < total so the grid has >= 2 steps and
    dimension_semantics=("parallel",) keeps both v7x TensorCores busy.
    """
    if total < 2 * quantum:
        return total
    half = _round_up((total + 1) // 2, quantum)  # < total whenever total >= 2*quantum
    return min(max_tile, half)


def db_to_amplitude(x, ref: float = 1.0):
    """Decibel-to-amplitude conversion via a Pallas TPU kernel."""
    x = jnp.asarray(x)
    if x.dtype == jnp.float64:
        # TODO(synk): TPU has no f64 vector path; computed at f32 precision.
        x = x.astype(jnp.float32)

    orig_shape = x.shape
    in_dtype = x.dtype
    out_dtype = in_dtype if jnp.issubdtype(in_dtype, jnp.floating) else jnp.float32

    # Precomputed constants (match torch semantics for ref <= 0 too).
    scale = math.log2(10.0) / 20.0
    if ref > 0.0:
        bias = 0.5 * math.log2(ref)
    elif ref == 0.0:
        bias = float("-inf")   # torch: log10(0) = -inf -> power 0 -> amp 0
    else:
        bias = float("nan")    # torch: log10(neg) = nan

    n = math.prod(orig_shape) if orig_shape else 1
    if n == 0:
        return jnp.zeros(orig_shape, out_dtype)

    kernel = functools.partial(_db_to_amp_kernel, scale=scale, bias=bias)
    cost = pl.CostEstimate(
        flops=2 * n,
        transcendentals=n,
        bytes_accessed=n * (jnp.dtype(in_dtype).itemsize + jnp.dtype(out_dtype).itemsize),
    )
    cparams = pltpu.CompilerParams(dimension_semantics=("parallel",))

    flat = x.reshape(-1)  # contiguous row-major -> free (bitcast) reshape

    if n % _LANE == 0:
        # Fast path: lane-dense 2-D slab, unmasked full-width loads/stores.
        rows = n // _LANE
        quantum = max(_sublane_quantum(in_dtype), _sublane_quantum(out_dtype))
        tr = _pick_tile(rows, _ROW_TILE, quantum)
        out = pl.pallas_call(
            kernel,
            out_shape=jax.ShapeDtypeStruct((rows, _LANE), out_dtype),
            grid_spec=pl.GridSpec(
                grid=(pl.cdiv(rows, tr),),
                in_specs=[pl.BlockSpec((tr, _LANE), lambda i: (i, 0))],
                out_specs=pl.BlockSpec((tr, _LANE), lambda i: (i, 0)),
            ),
            compiler_params=cparams,
            cost_estimate=cost,
        )(flat.reshape(rows, _LANE))
    else:
        # Ragged path: flat 1-D layout, 128-multiple blocks; Pallas masks the
        # partial last block, so no jnp.pad and no output slice are needed.
        blk = _pick_tile(n, _FLAT_TILE, _LANE)
        out = pl.pallas_call(
            kernel,
            out_shape=jax.ShapeDtypeStruct((n,), out_dtype),
            grid_spec=pl.GridSpec(
                grid=(pl.cdiv(n, blk),),
                in_specs=[pl.BlockSpec((blk,), lambda i: (i,))],
                out_specs=pl.BlockSpec((blk,), lambda i: (i,)),
            ),
            compiler_params=cparams,
            cost_estimate=cost,
        )(flat)

    return out.reshape(orig_shape)


class DbToAmplitude:
    """JAX/Pallas equivalent of the PyTorch DbToAmplitude module."""

    def __init__(self, ref: float = 1.0):
        self.ref = ref

    def __call__(self, x):
        return db_to_amplitude(x, ref=self.ref)

    forward = __call__

    def __repr__(self):
        return f"DbToAmplitude(ref={self.ref})"


def _reference(x, ref: float = 1.0):
    x = jnp.asarray(x, jnp.float32)
    power = jnp.power(10.0, x / 10.0 + jnp.log10(jnp.float32(ref)))
    return jnp.power(power, 0.5)


if __name__ == "__main__":
    k0, k1 = jax.random.split(jax.random.PRNGKey(0))

    # Decibel-valued input, NCHW-like shape from the test harness.
    x = jax.random.normal(k0, (2, 4, 16, 16), dtype=jnp.float32) * 20.0

    mod = DbToAmplitude(ref=1.0)
    out = jax.block_until_ready(mod(x))
    assert out.shape == x.shape and out.dtype == x.dtype
    assert jnp.allclose(out, _reference(x, ref=1.0), atol=1e-4, rtol=1e-4)

    # Non-default ref value.
    out2 = jax.block_until_ready(DbToAmplitude(ref=2.5)(x))
    assert jnp.allclose(out2, _reference(x, ref=2.5), atol=1e-4, rtol=1e-4)

    # numel not a multiple of 128 -> masked 1-D path, two grid steps.
    y = jax.random.normal(k1, (7, 300), dtype=jnp.float32) * 20.0
    out3 = jax.block_until_ready(mod(y))
    assert out3.shape == y.shape
    assert jnp.allclose(out3, _reference(y, ref=1.0), atol=1e-4, rtol=1e-4)

    # Tiny ragged input -> single full-extent 1-D block.
    z = jax.random.normal(k1, (3, 5, 7), dtype=jnp.float32) * 20.0
    out4 = jax.block_until_ready(mod(z))
    assert jnp.allclose(out4, _reference(z, ref=1.0), atol=1e-4, rtol=1e-4)

    print("KERNEL_OK")
</pallas_src>

<mosaic_0001>
module attributes {stable_mosaic.version = 11 : i64} {
  func.func @_db_to_amp_kernel(%arg0: i32, %arg1: memref<8x128xf32, #tpu.memory_space<vmem>>, %arg2: memref<8x128xf32, #tpu.memory_space<vmem>>) attributes {dimension_semantics = [#tpu.dimension_semantics<parallel>], iteration_bounds = array<i64: 2>, scalar_prefetch = 0 : i64, scratch_operands = 0 : i64, tpu.core_type = #tpu.core_type<tc>, window_params = [{transform_indices = @transform_0, window_bounds = array<i64: 8, 128>}, {transform_indices = @transform_1, window_bounds = array<i64: 8, 128>}]} {
    %c0 = arith.constant 0 : index
    %c0_0 = arith.constant 0 : index
    %0 = vector.load %arg1[%c0, %c0_0] : memref<8x128xf32, #tpu.memory_space<vmem>>, vector<8x128xf32>
    %cst = arith.constant 0.166096404 : f32
    %1 = vector.broadcast %cst : f32 to vector<8x128xf32>
    %2 = arith.mulf %0, %1 : vector<8x128xf32>
    %cst_1 = arith.constant 0.000000e+00 : f32
    %3 = vector.broadcast %cst_1 : f32 to vector<8x128xf32>
    %4 = arith.addf %2, %3 : vector<8x128xf32>
    %5 = math.exp2 %4 : vector<8x128xf32>
    %c0_2 = arith.constant 0 : index
    %c0_3 = arith.constant 0 : index
    %6 = vector.load %arg2[%c0_2, %c0_3] : memref<8x128xf32, #tpu.memory_space<vmem>>, vector<8x128xf32>
    tpu.vector_store %arg2[%c0_2, %c0_3], %5 {strides = array<i32>} : memref<8x128xf32, #tpu.memory_space<vmem>>, vector<8x128xf32>,
    return
  }
  func.func @transform_0(%arg0: i32) -> (i32, i32) {
    %c0_i32 = arith.constant 0 : i32
    %c0_i32_0 = arith.constant 0 : i32
    return %arg0, %c0_i32 : i32, i32
  }
  func.func @transform_1(%arg0: i32) -> (i32, i32) {
    %c0_i32 = arith.constant 0 : i32
    %c0_i32_0 = arith.constant 0 : i32
    return %arg0, %c0_i32 : i32, i32
  }
}

</mosaic_0001>

<llo_original>
// kernel: tpu_custom_call.1
$region0: #{tpu_custom_call.1}
  #allocation0 [shape = 'u32[]', space=smem, size = 0x4, offset = 0x4, fixed_abs, tag = 'smem constant byte address 0x4 - core index']
  #allocation1 [shape = 'u32[72,128]{1,0:T(1,128)}', space=vmem, size = 0x9000, scoped, tag = 'internal scratch']
  %s0 = inlined_call_operand.hbm [shape: f32[16,128], index: 0, kind: input, shape index: {}]
  %s1 = inlined_call_operand.hbm [shape: f32[16,128], index: 1, kind: output, shape index: {}]
  %s2 = sld [smem:[#allocation0]]
  $region41: #{tpu_custom_call.1} parent=0
    _
  %s4 = ssub.s32 1, %s2
  %s5 = scalar_select 0, %s4, %s2
  $region1: #{tpu_custom_call.1} parent=0
    #allocation2 [shape = 'u8[8192]{0}', space=vmem, size = 0x2000, scoped, tag = 'input window, operand 0']
    #allocation3 [shape = 's32[2]{0}', space=sflag, size = 0x8, scoped, tag = 'scoped memory for tpu_custom_call.1']
    #allocation4 [shape = 's32[2]{0}', space=sflag, size = 0x8, scoped, tag = 'scoped memory for tpu_custom_call.1']
    #allocation5 [shape = 'u8[8192]{0}', space=vmem, size = 0x2000, scoped, tag = 'output window, operand 0']
    %6 = vsyncpa [#allocation3], 0
    %s7 = scalar_lea.sflag [#allocation3], 1
    %8 = vsyncpa %s7, 0
    %9 = vsyncpa [#allocation4], 0
    %s10 = scalar_lea.sflag [#allocation4], 1
    %11 = vsyncpa %s10, 0
    loop: start=0, step=1, limit=4
    $region2: #{tpu_custom_call.1} parent=1 // loop_pre_header
      _
    $region3: #{tpu_custom_call.1} parent=1 // loop_header
      %s13 = sphi 0, %s17
      %p14 = scmp.ge.s32.totalorder %s13, 4
      %s23 = sphi 0, %s25
      %s26 = sphi 0, %s23
      %s27 = sphi 0, %s26
      %s43 = sphi 0, %s27
      %s49 = sphi 0, %s51
      %s52 = sphi 0, %s49
      %s53 = sphi 0, %s52
      %s69 = sphi 0, %s53
    $region4: #{tpu_custom_call.1} parent=1 // loop_header_branch
      %16 = sbr.rel (%p14) target = $region8
    $region5: #{tpu_custom_call.1} parent=1 // loop_body
      %s18 = ssub.s32 %s13, 1
      %s19 = ssub.s32 %s13, 2
      %s20 = sadd.s32 %s13, 1
      %s21 = ssub.s32 %s13, %s20
      %p22 = scmp.eq.s32.totalorder %s21, 0
      %s24 = sadd.s32 %s23, 1
      %s25 = scalar_select %p22, %s23, %s24
      %p28 = pneg %p22
      %p29 = scmp.eq.s32.totalorder %s13, 1
      %p30 = por %p28, %p29
      %p31 = scmp.ne.s32.totalorder %s23, %s26
      %p32 = scmp.eq.s32.totalorder %s13, 0
      %p33 = por %p31, %p32
      %p34 = scmp.ne.s32.totalorder %s23, %s26
      %p35 = scmp.eq.s32.totalorder %s18, 1
      %p36 = por %p34, %p35
      %p37 = scmp.ne.s32.totalorder %s26, %s27
      %p38 = scmp.eq.s32.totalorder %s18, 0
      %p39 = por %p37, %p38
      %p40 = scmp.ne.s32.totalorder %s26, %s27
      %p41 = scmp.eq.s32.totalorder %s19, 1
      %p42 = por %p40, %p41
      %p44 = scmp.ne.s32.totalorder %s27, %s43
      %p45 = scmp.eq.s32.totalorder %s19, 0
      %p46 = por %p44, %p45
      %s47 = ssub.s32 %s13, %s20
      %p48 = scmp.eq.s32.totalorder %s47, 0
      %s50 = sadd.s32 %s49, 1
      %s51 = scalar_select %p48, %s49, %s50
      %p54 = pneg %p48
      %p55 = scmp.eq.s32.totalorder %s13, 1
      %p56 = por %p54, %p55
      %p57 = scmp.ne.s32.totalorder %s49, %s52
      %p58 = scmp.eq.s32.totalorder %s13, 0
      %p59 = por %p57, %p58
      %p60 = scmp.ne.s32.totalorder %s49, %s52
      %p61 = scmp.eq.s32.totalorder %s18, 1
      %p62 = por %p60, %p61
      %p63 = scmp.ne.s32.totalorder %s52, %s53
      %p64 = scmp.eq.s32.totalorder %s18, 0
      %p65 = por %p63, %p64
      %p66 = scmp.ne.s32.totalorder %s52, %s53
      %p67 = scmp.eq.s32.totalorder %s19, 1
      %p68 = por %p66, %p67
      %p70 = scmp.ne.s32.totalorder %s53, %s69
      %p71 = scmp.eq.s32.totalorder %s19, 0
      %p72 = por %p70, %p71
      %p73 = scmp.le.s32.totalorder 1, %s13
      %p74 = scmp.lt.s32.totalorder %s13, 3
      %p75 = pnand %p73, %p74
      %p76 = pneg %p75
      // Predicated region
      $region9: #{tpu_custom_call.1} parent=5 // pred_check
        _
      $region10: #{tpu_custom_call.1} parent=5 // pred_check_branch
        %78 = sbr.rel (%p75) target = $region12
      $region11: #{tpu_custom_call.1} parent=5 // pred_region
        %s79 = ssub.s32 %s13, 1
      $region12: #{tpu_custom_call.1} parent=5 // pred_fallthru
        _
      %p80 = scmp.lt.s32.totalorder %s13, 2
      // Predicated region
      $region13: #{tpu_custom_call.1} parent=5 // pred_check
        %p81 = pneg %p80
      $region14: #{tpu_custom_call.1} parent=5 // pred_check_branch
        %83 = sbr.rel (%p81) target = $region16
      $region15: #{tpu_custom_call.1} parent=5 // pred_region
        // Predicated region
        $region17: #{tpu_custom_call.1} parent=15 // pred_check
          %p84 = pneg %p33
        $region18: #{tpu_custom_call.1} parent=15 // pred_check_branch
          %86 = sbr.rel (%p84) target = $region20
        $region19: #{tpu_custom_call.1} parent=15 // pred_region
          %s87 = sand.u32 %s23, 1
          %s88 = scalar_lea.sflag [#allocation3], %s87
          %s89 = sand.u32 %s23, 1
          %s90 = smul.addr %s89, 8
          %s91 = scalar_lea.vmem [#allocation2], %s90
          %93 = vsyncadd %s88, 0
          %s94 = smul.addr %s13, 8
          %s95 = scalar_lea.hbm %s0, %s94
          %s97 = sshll.u32 %s95, 4
          %s98 = int_to_ptr.hbm [resolvable:$true] %s97
          %s99 = sshll.u32 %s91, 4
          %s100 = int_to_ptr.vmem [resolvable:$true] %s99
          %102 = dma.hbm_to_vmem [thread:$0]  %s98, 128, %s100, %s88
        $region20: #{tpu_custom_call.1} parent=15 // pred_fallthru
          _
      $region16: #{tpu_custom_call.1} parent=5 // pred_fallthru
        _
      %p103 = scmp.le.s32.totalorder 1, %s13
      %p104 = scmp.lt.s32.totalorder %s13, 3
      %p105 = pnand %p103, %p104
      %p106 = pneg %p105
      // Predicated region
      $region21: #{tpu_custom_call.1} parent=5 // pred_check
        _
      $region22: #{tpu_custom_call.1} parent=5 // pred_check_branch
        %108 = sbr.rel (%p105) target = $region24
      $region23: #{tpu_custom_call.1} parent=5 // pred_region
        %s109 = ssub.s32 %s13, 1
        %s110 = sand.u32 %s26, 1
        %s111 = scalar_lea.sflag [#allocation3], %s110
        %s112 = sand.u32 %s26, 1
        %s113 = smul.addr %s112, 8
        %s114 = scalar_lea.vmem [#allocation2], %s113
        // Predicated region
        $region25: #{tpu_custom_call.1} parent=23 // pred_check
          %p115 = pneg %p39
        $region26: #{tpu_custom_call.1} parent=23 // pred_check_branch
          %117 = sbr.rel (%p115) target = $region28
        $region27: #{tpu_custom_call.1} parent=23 // pred_region
          %119 = dma.done %s111, 128
        $region28: #{tpu_custom_call.1} parent=23 // pred_fallthru
          _
        %s120 = sand.u32 %s26, 1
        %s121 = scalar_lea.sflag [#allocation3], %s120
        %s122 = sand.u32 %s26, 1
        %s123 = smul.addr %s122, 8
        %s124 = scalar_lea.vmem [#allocation2], %s123
        %p125 = pneg %p39
        %p126 = pneg %p36
        %p127 = pneg %p65
        %p128 = pneg %p62
        %s129 = sand.u32 %s52, 1
        %s130 = scalar_lea.sflag [#allocation4], %s129
        %s131 = sand.u32 %s52, 1
        %s132 = smul.addr %s131, 8
        %s133 = scalar_lea.vmem [#allocation5], %s132
        %v134 = vld [vmem:[%s114] sm:$0xff]
        %v135 = vmul.f32 %v134, 0.1660964
        %v136 = vadd.f32 %v135, 0.0
        %v137 = vpow.pop %v136
        %138 = vst [vmem:[%s133] sm:$0xff] %v137
        %s139 = sand.u32 %s52, 1
        %s140 = scalar_lea.sflag [#allocation4], %s139
        %s141 = sand.u32 %s52, 1
        %s142 = smul.addr %s141, 8
        %s143 = scalar_lea.vmem [#allocation5], %s142
        // Predicated region
        $region29: #{tpu_custom_call.1} parent=23 // pred_check
          %p144 = pneg %p62
        $region30: #{tpu_custom_call.1} parent=23 // pred_check_branch
          %146 = sbr.rel (%p144) target = $region32
        $region31: #{tpu_custom_call.1} parent=23 // pred_region
          %148 = vsyncadd %s140, 0
          %s149 = smul.addr %s18, 8
          %s150 = scalar_lea.hbm %s1, %s149
          %s152 = sshll.u32 %s143, 4
          %s153 = int_to_ptr.vmem [resolvable:$true] %s152
          %s154 = sshll.u32 %s150, 4
          %s155 = int_to_ptr.hbm [resolvable:$true] %s154
          %157 = dma.vmem_to_hbm [thread:$0]  %s153, 128, %s155, %s140
        $region32: #{tpu_custom_call.1} parent=23 // pred_fallthru
          _
      $region24: #{tpu_custom_call.1} parent=5 // pred_fallthru
        _
      %p158 = scmp.le.s32.totalorder 2, %s13
      // Predicated region
      $region33: #{tpu_custom_call.1} parent=5 // pred_check
        %p159 = pneg %p158
      $region34: #{tpu_custom_call.1} parent=5 // pred_check_branch
        %161 = sbr.rel (%p159) target = $region36
      $region35: #{tpu_custom_call.1} parent=5 // pred_region
        %s162 = ssub.s32 %s13, 2
        // Predicated region
        $region37: #{tpu_custom_call.1} parent=35 // pred_check
          %p163 = pneg %p68
        $region38: #{tpu_custom_call.1} parent=35 // pred_check_branch
          %165 = sbr.rel (%p163) target = $region40
        $region39: #{tpu_custom_call.1} parent=35 // pred_region
          %s166 = sand.u32 %s53, 1
          %s167 = scalar_lea.sflag [#allocation4], %s166
          %s168 = sand.u32 %s53, 1
          %s169 = smul.addr %s168, 8
          %s170 = scalar_lea.vmem [#allocation5], %s169
          %172 = dma.done %s167, 128
        $region40: #{tpu_custom_call.1} parent=35 // pred_fallthru
          _
      $region36: #{tpu_custom_call.1} parent=5 // pred_fallthru
        _
    $region6: #{tpu_custom_call.1} parent=1 // loop_footer
      %s17 = sadd.s32 1, %s13
    $region7: #{tpu_custom_call.1} parent=1 // loop_footer_branch
      %12 = sbr.rel target = $region3
    $region8: #{tpu_custom_call.1} parent=1 // loop_exit
      _
    %173 = vsyncpa [#allocation3], 1
    %s174 = scalar_lea.sflag [#allocation3], 1
    %175 = vsyncpa %s174, 1
    %176 = vsyncpa [#allocation4], 1
    %s177 = scalar_lea.sflag [#allocation4], 1
    %178 = vsyncpa %s177, 1

</llo_original>
